<compile_context>
chip_gen: v5e
topology: v5e:2x2
jax: 0.10.0
libtpu: 0.0.40
codegen_flags: <defaults>
</compile_context>

<pallas_src>
import functools

import jax
import jax.numpy as jnp
from jax.experimental import pallas as pl
from jax.experimental.pallas import tpu as pltpu


# ------------------------------ fused kernel -------------------------------- #

def _blocks_kernel(x_ref, w_ref, b_ref, wf_ref, bf_ref, out_ref,
                   *, M, H, C, comp_c, layers, sh_prev, sh_next):
    """Entire `blocks` forward for Bt batch elements, VMEM/register-resident.

    x_ref   : (M, WC)                lane-dense activation slab, M = Bt*H
    w_ref   : (layers, 3*WC, WC)     banded per-layer weight (3x3 conv + 1x1
                                     compress + channel concat folded in), bf16
    b_ref   : (layers, 1, WC)        per-layer bias row, f32
    wf_ref  : (WC, WC)               block-diagonal localfusion 1x1 weight, bf16
    bf_ref  : (1, WC)                localfusion bias row, f32
    out_ref : (M, WC)
    """
    WC = x_ref.shape[-1]
    mm_dtype = w_ref.dtype                      # bf16 operands, f32 accumulation
    cur = x_ref[...]                            # (M, WC) f32

    # (1, WC) lane mask: which channels are "explore" outputs (they get ReLU).
    ch = jax.lax.broadcasted_iota(jnp.int32, (1, WC), 1) % C
    explore_mask = ch >= comp_c

    # (M, 1) sublane masks marking per-image vertical borders (zero padding).
    row_in_img = jax.lax.broadcasted_iota(jnp.int32, (M, 1), 0) % H
    has_prev = row_in_img != 0                  # row y=0 has no y-1 neighbor
    has_next = row_in_img != (H - 1)            # row y=H-1 has no y+1 neighbor

    # layers is small (2); static unroll.  TODO(synk): switch to lax.fori_loop
    # with dynamic w_ref[l]/b_ref[l] indexing if layers grows beyond ~4.
    for l in range(layers):
        # Row y of `prev_r` holds cur[y-1], row y of `next_r` holds cur[y+1];
        # wrap-around / cross-image rows are zeroed (SAME zero padding).
        prev_r = jnp.where(has_prev, pltpu.roll(cur, shift=sh_prev, axis=0), 0.0)
        next_r = jnp.where(has_next, pltpu.roll(cur, shift=sh_next, axis=0), 0.0)
        # All horizontal (dx) taps + the 1x1 compress are folded into the
        # banded weight, so the whole layer is ONE MXU matmul with K = 3*WC.
        lhs = jnp.concatenate([prev_r.astype(mm_dtype),
                               cur.astype(mm_dtype),
                               next_r.astype(mm_dtype)], axis=1)   # (M, 3*WC)
        cur = jnp.dot(lhs, w_ref[l],
                      preferred_element_type=jnp.float32) + b_ref[l]
        cur = jnp.where(explore_mask, jnp.maximum(cur, 0.0), cur)

    # localfusion: ReLU -> 1x1 conv (block-diagonal matmul) -> + residual.
    h = jnp.maximum(cur, 0.0).astype(mm_dtype)
    y = jnp.dot(h, wf_ref[...], preferred_element_type=jnp.float32) + bf_ref[...]
    out_ref[...] = (y + x_ref[...]).astype(out_ref.dtype)


# --------------------------- offline weight folding ------------------------- #

def _fold_layer_weights(w1, b1, w3_hwio, b3, W):
    """Fold one `one_conv` layer into a (3*W*C, W*C) banded matrix + bias row.

    Output channel order is [compress (comp_c) | explore (expl_c)], matching
    torch.cat([compress(x), relu(explore(x))], dim=channel).
    """
    C, comp_c = w1.shape
    # Per-tap combined weight (3, 3, C_in, C_out); compress reads only the
    # center tap, explore uses all nine taps.
    wc = jnp.zeros((3, 3, C, C), jnp.float32)
    wc = wc.at[:, :, :, comp_c:].set(w3_hwio)
    wc = wc.at[1, 1, :, :comp_c].set(w1)
    # Banded placement along width: M[dy, p, ci, w, co] = wc[dy, dx, ci, co]
    # with p = w + dx - 1; out-of-range p (the zero padding columns) is dropped
    # because its contribution is exactly zero.
    M = jnp.zeros((3, W, C, W, C), jnp.float32)
    for dx in range(3):
        eye = jnp.eye(W, W, k=1 - dx, dtype=jnp.float32)   # eye[p, w] = [p == w + dx - 1]
        M = M + jnp.einsum('pw,dic->dpiwc', eye, wc[:, dx])
    M = M.reshape(3 * W * C, W * C)
    bias = jnp.tile(jnp.concatenate([b1.reshape(-1), b3.reshape(-1)]), W)
    return M, bias.reshape(1, W * C)


def _fold_fusion_weights(wf, bf, W):
    """localfusion 1x1 conv as a block-diagonal (W*C, W*C) matrix + bias row."""
    C = wf.shape[0]
    wf_bd = jnp.einsum('vw,ic->viwc', jnp.eye(W, dtype=jnp.float32), wf)
    wf_bd = wf_bd.reshape(W * C, W * C)
    bf_row = jnp.tile(bf.reshape(-1), W).reshape(1, W * C)
    return wf_bd, bf_row


def fold_blocks_params(params, W, matmul_dtype=jnp.bfloat16):
    """One-time folding of the raw per-layer weights (hoisted out of forward)."""
    folded_w, folded_b = [], []
    for (w1, b1, w3_hwio, b3) in params["blocks"]:
        Ml, bl = _fold_layer_weights(w1, b1, w3_hwio, b3, W)
        folded_w.append(Ml)
        folded_b.append(bl)
    wf_bd, bf_row = _fold_fusion_weights(params["wf"], params["bf"], W)
    return {
        "w_all": jnp.stack(folded_w).astype(matmul_dtype),   # (layers, 3WC, WC)
        "b_all": jnp.stack(folded_b),                        # (layers, 1, WC) f32
        "wf_bd": wf_bd.astype(matmul_dtype),                 # (WC, WC)
        "bf_row": bf_row,                                    # (1, WC) f32
    }


# --------------------------- roll-direction probe ---------------------------- #

def _roll_matches_numpy():
    """Resolve pltpu.roll's rotation convention once with a tiny probe kernel."""
    def k(x_ref, o_ref):
        o_ref[...] = pltpu.roll(x_ref[...], shift=1, axis=0)
    x = jnp.arange(8 * 128, dtype=jnp.float32).reshape(8, 128)
    y = pl.pallas_call(
        k, out_shape=jax.ShapeDtypeStruct((8, 128), jnp.float32))(x)
    # numpy convention: roll(x, 1)[1] == x[0]
    return bool(jnp.all(y[1] == x[0]))


# --------------------------------- wrapper ----------------------------------- #

def _pick_batch_tile(B, H, target_rows=128):
    """Largest divisor Bt of B with Bt*H close to target_rows (MXU M rows)."""
    bt = max(1, min(B, max(1, target_rows // H)))
    while B % bt:
        bt -= 1
    if (bt * H) % 8 != 0:          # block sublane dim must be a multiple of 8
        bt = B                     # fall back to a single full-batch block
    return bt


@functools.partial(jax.jit, static_argnames=("comp_c", "roll_numpy"))
def blocks_forward(x, w_all, b_all, wf_bd, bf_row, *, comp_c, roll_numpy=True):
    """Full `blocks` forward.  x: (B, H, W, C) NHWC float32."""
    B, H, W, C = x.shape
    WC = W * C
    layers = w_all.shape[0]
    assert w_all.shape == (layers, 3 * WC, WC)

    Bt = _pick_batch_tile(B, H)
    M = Bt * H
    G = B // Bt

    x_flat = x.reshape(B * H, WC)            # lane-dense slab (free reshape)
    kernel = functools.partial(
        _blocks_kernel, M=M, H=H, C=C, comp_c=comp_c, layers=layers,
        sh_prev=(1 if roll_numpy else M - 1),     # row y <- cur[y-1]
        sh_next=(M - 1 if roll_numpy else 1))     # row y <- cur[y+1]

    y = pl.pallas_call(
        kernel,
        out_shape=jax.ShapeDtypeStruct((B * H, WC), x.dtype),
        grid=(G,),
        in_specs=[
            pl.BlockSpec((M, WC), lambda g: (g, 0)),
            pl.BlockSpec((layers, 3 * WC, WC), lambda g: (0, 0, 0)),
            pl.BlockSpec((layers, 1, WC), lambda g: (0, 0, 0)),
            pl.BlockSpec((WC, WC), lambda g: (0, 0)),
            pl.BlockSpec((1, WC), lambda g: (0, 0)),
        ],
        out_specs=pl.BlockSpec((M, WC), lambda g: (g, 0)),
        compiler_params=pltpu.CompilerParams(
            dimension_semantics=("parallel",)),
    )(x_flat, w_all, b_all, wf_bd, bf_row)
    return y.reshape(B, H, W, C)


# ------------------------------ parameter init ------------------------------- #

def init_params(key, input_feature, compress, layers):
    C, comp_c = input_feature, compress
    expl_c = C - comp_c
    params = {"blocks": []}
    for _ in range(layers):
        key, k1, k2, k3, k4 = jax.random.split(key, 5)
        w1 = jax.random.normal(k1, (C, comp_c), jnp.float32) * 0.1
        b1 = jax.random.normal(k2, (comp_c,), jnp.float32) * 0.1
        w3 = jax.random.normal(k3, (3, 3, C, expl_c), jnp.float32) * 0.1  # HWIO
        b3 = jax.random.normal(k4, (expl_c,), jnp.float32) * 0.1
        params["blocks"].append((w1, b1, w3, b3))
    key, kf, kb = jax.random.split(key, 3)
    params["wf"] = jax.random.normal(kf, (C, C), jnp.float32) * 0.1
    params["bf"] = jax.random.normal(kb, (C,), jnp.float32) * 0.1
    return params


# -------------------------------- reference ---------------------------------- #

def blocks_reference(x, params):
    """Pure-JAX (XLA) reference matching the PyTorch semantics, NHWC."""
    out = x
    for (w1, b1, w3_hwio, b3) in params["blocks"]:
        comp = jnp.einsum("bhwc,cd->bhwd", out, w1) + b1
        expl = jax.lax.conv_general_dilated(
            out, w3_hwio, window_strides=(1, 1), padding="SAME",
            dimension_numbers=("NHWC", "HWIO", "NHWC")) + b3
        expl = jnp.maximum(expl, 0.0)
        out = jnp.concatenate([comp, expl], axis=-1)
    h = jnp.maximum(out, 0.0)
    y = jnp.einsum("bhwc,cd->bhwd", h, params["wf"]) + params["bf"]
    return y + x


# ----------------------------------- main ------------------------------------ #

if __name__ == "__main__":
    # W*C = 128 lanes; Bt = 8 -> M = 128 MXU rows per grid step, grid=(2,)
    # so both v7x TensorCores get work.
    B, C, H, W = 16, 8, 16, 16
    compress, layers = 3, 2

    key = jax.random.PRNGKey(0)
    key, kx = jax.random.split(key)
    x = jax.random.normal(kx, (B, H, W, C), jnp.float32)   # NHWC
    params = init_params(key, C, compress, layers)

    folded = fold_blocks_params(params, W)      # folded ONCE, outside the forward
    roll_numpy = _roll_matches_numpy()

    y = blocks_forward(x, folded["w_all"], folded["b_all"],
                       folded["wf_bd"], folded["bf_row"],
                       comp_c=compress, roll_numpy=roll_numpy)
    y = jax.block_until_ready(y)

    y_ref = blocks_reference(x, params)
    assert y.shape == (B, H, W, C)
    err = float(jnp.max(jnp.abs(y - y_ref)))
    # bf16 MXU operands with f32 accumulation: tolerance relaxed vs pure-f32.
    assert jnp.allclose(y, y_ref, atol=5e-2, rtol=5e-2), err

    print("KERNEL_OK")
</pallas_src>

<mosaic_0001>
module attributes {stable_mosaic.version = 11 : i64} {
  func.func @k(%arg0: memref<8x128xf32, #tpu.memory_space<vmem>>, %arg1: memref<8x128xf32, #tpu.memory_space<vmem>>) attributes {dimension_semantics = [], scalar_prefetch = 0 : i64, scratch_operands = 0 : i64, tpu.core_type = #tpu.core_type<tc>} {
    %c0 = arith.constant 0 : index
    %c0_0 = arith.constant 0 : index
    %0 = vector.load %arg0[%c0, %c0_0] : memref<8x128xf32, #tpu.memory_space<vmem>>, vector<8x128xf32>
    %c1_i32 = arith.constant 1 : i32
    %1 = tpu.dynamic_rotate %0 by %c1_i32 dim 0 : vector<8x128xf32>, i32 -> vector<8x128xf32>
    %c0_1 = arith.constant 0 : index
    %c0_2 = arith.constant 0 : index
    %2 = vector.load %arg1[%c0_1, %c0_2] : memref<8x128xf32, #tpu.memory_space<vmem>>, vector<8x128xf32>
    tpu.vector_store %arg1[%c0_1, %c0_2], %1 {strides = array<i32>} : memref<8x128xf32, #tpu.memory_space<vmem>>, vector<8x128xf32>,
    return
  }
}

</mosaic_0001>

<llo_original>
// kernel: tpu_custom_call.1
$region0: #{tpu_custom_call.1}
  #allocation0 [shape = 'u32[]', space=smem, size = 0x4, offset = 0x4, fixed_abs, tag = 'smem constant byte address 0x4 - core index']
  #allocation1 [shape = 'u32[72,128]{1,0:T(1,128)}', space=vmem, size = 0x9000, scoped, tag = 'internal scratch']
  %s0 = inlined_call_operand.hbm [shape: f32[8,128], index: 0, kind: input, shape index: {}]
  %s1 = inlined_call_operand.hbm [shape: f32[8,128], index: 1, kind: output, shape index: {}]
  %s2 = sld [smem:[#allocation0]]
  $region18: #{tpu_custom_call.1} parent=0
    _
  %s4 = ssub.s32 1, %s2
  %s5 = scalar_select 0, %s4, %s2
  $region1: #{tpu_custom_call.1} parent=0
    #allocation2 [shape = 'u8[4096]{0}', space=vmem, size = 0x1000, scoped, tag = 'input window, operand 0, single buffered']
    #allocation3 [shape = 's32[1]{0}', space=sflag, size = 0x4, scoped, tag = 'scoped memory for tpu_custom_call.1']
    #allocation4 [shape = 's32[1]{0}', space=sflag, size = 0x4, scoped, tag = 'scoped memory for tpu_custom_call.1']
    #allocation5 [shape = 'u8[4096]{0}', space=vmem, size = 0x1000, scoped, tag = 'output window, operand 0, single buffered']
    %6 = vsyncpa [#allocation3], 0
    %7 = vsyncpa [#allocation4], 0
    // Predicated region
    $region2: #{tpu_custom_call.1} parent=1 // pred_check
      _
    $region3: #{tpu_custom_call.1} parent=1 // pred_check_branch
      %9 = sbr.rel (0) target = $region5
    $region4: #{tpu_custom_call.1} parent=1 // pred_region
      %11 = vsyncadd [#allocation3], 0
      %s13 = sshll.u32 %s0, 4
      %s14 = int_to_ptr.hbm [resolvable:$true] %s13
      %s15 = sshll.u32 [#allocation2], 4
      %s16 = int_to_ptr.vmem [resolvable:$true] %s15
      %18 = dma.hbm_to_vmem [thread:$0]  %s14, 128, %s16, [#allocation3]
    $region5: #{tpu_custom_call.1} parent=1 // pred_fallthru
      _
    // Predicated region
    $region6: #{tpu_custom_call.1} parent=1 // pred_check
      _
    $region7: #{tpu_custom_call.1} parent=1 // pred_check_branch
      %20 = sbr.rel (0) target = $region9
    $region8: #{tpu_custom_call.1} parent=1 // pred_region
      %22 = dma.done [#allocation3], 128
    $region9: #{tpu_custom_call.1} parent=1 // pred_fallthru
      _
    %v23 = vld [vmem:[#allocation2] sm:$0xff]
    %v24 = vrot.slane %v23, 7
    %25 = vst [vmem:[#allocation5] sm:$0xff] %v24
    // Predicated region
    $region10: #{tpu_custom_call.1} parent=1 // pred_check
      _
    $region11: #{tpu_custom_call.1} parent=1 // pred_check_branch
      %27 = sbr.rel (0) target = $region13
    $region12: #{tpu_custom_call.1} parent=1 // pred_region
      %29 = vsyncadd [#allocation4], 0
      %s31 = sshll.u32 [#allocation5], 4
      %s32 = int_to_ptr.vmem [resolvable:$true] %s31
      %s33 = sshll.u32 %s1, 4
      %s34 = int_to_ptr.hbm [resolvable:$true] %s33
      %36 = dma.vmem_to_hbm [thread:$0]  %s32, 128, %s34, [#allocation4]
    $region13: #{tpu_custom_call.1} parent=1 // pred_fallthru
      _
    // Predicated region
    $region14: #{tpu_custom_call.1} parent=1 // pred_check
      _
    $region15: #{tpu_custom_call.1} parent=1 // pred_check_branch
      %38 = sbr.rel (0) target = $region17
    $region16: #{tpu_custom_call.1} parent=1 // pred_region
      %40 = dma.done [#allocation4], 128
    $region17: #{tpu_custom_call.1} parent=1 // pred_fallthru
      _
    %41 = vsyncpa [#allocation3], 1
    %42 = vsyncpa [#allocation4], 1

</llo_original>
